<compile_context>
chip_gen: v7x
topology: tpu7x:2x2x1
jax: 0.10.0
libtpu: 0.0.40
codegen_flags: <defaults>
</compile_context>

<pallas_src>
import jax
import jax.numpy as jnp
import numpy as np
from jax.experimental import pallas as pl
from jax.experimental.pallas import tpu as pltpu


# --------------------------------------------------------------------------
# Fused single-pass kernel: one batch element per grid step, full spatial slab.
# --------------------------------------------------------------------------
def _fused_kernel(x_ref, w1_ref, w2_ref, o_ref):
    # x_ref : (1, C, S)  full spatial extent of one batch element (NCDHW order)
    # w1_ref: (mid, C)   first 1x1x1 conv weight
    # w2_ref: (C, mid)   second 1x1x1 conv weight
    x = x_ref[0]                                                    # (C, S)

    # Global average pool over the flattened spatial axis (XLU lane reduce).
    mean = jnp.mean(x.astype(jnp.float32), axis=1, keepdims=True)   # (C, 1)

    # avg path: fc(mean) — tiny (mid/C wide) matmuls, f32 throughout.
    h_avg = jnp.maximum(
        jnp.dot(w1_ref[...].astype(jnp.float32), mean,
                preferred_element_type=jnp.float32), 0.0)           # (mid, 1)
    y_avg = jnp.dot(w2_ref[...].astype(jnp.float32), h_avg,
                    preferred_element_type=jnp.float32)             # (C, 1)

    # per-voxel path: fc(x)  (MaxPool3d(1) == identity).
    h = jnp.maximum(
        jnp.dot(w1_ref[...], x, preferred_element_type=jnp.float32), 0.0)  # (mid, S)
    y = jnp.dot(w2_ref[...], h, preferred_element_type=jnp.float32)        # (C, S)

    o_ref[0] = jax.nn.sigmoid(y + y_avg).astype(o_ref.dtype)


# --------------------------------------------------------------------------
# Tiled fallback kernel: avg path precomputed in the wrapper (one fused XLA
# reduction), per-voxel path tiled along the flattened spatial axis.
# --------------------------------------------------------------------------
def _tiled_kernel(x_ref, yavg_ref, w1_ref, w2_ref, o_ref):
    # x_ref   : (1, C, TS)  one spatial tile of one batch element
    # yavg_ref: (1, C, 1)   precomputed fc(avg_pool(x)) for this batch element (f32)
    x = x_ref[0]                                                    # (C, TS)
    h = jnp.maximum(
        jnp.dot(w1_ref[...], x, preferred_element_type=jnp.float32), 0.0)  # (mid, TS)
    y = jnp.dot(w2_ref[...], h, preferred_element_type=jnp.float32)        # (C, TS)
    o_ref[0] = jax.nn.sigmoid(y + yavg_ref[0]).astype(o_ref.dtype)


def _choose_spatial_tile(S, C, itemsize, max_tile_bytes):
    """Tile width along the flattened spatial axis for the tiled path.

    TS is either the full S (allowed for any S) or a multiple of 128
    (lane-dense, unmasked stores; Pallas masks the partial last tile, which is
    safe because the per-voxel path is purely local after hoisting the mean).
    """
    ts = (max_tile_bytes // max(C * itemsize, 1)) // 128 * 128
    ts = max(128, ts)
    return S if S <= ts else ts


def channel_attention(x_ncdhw, w1, w2, *,
                      max_tile_bytes=2 << 20,
                      fuse_slab_bytes=2 << 20):
    """x_ncdhw: (N, C, D, H, W); w1: (mid, C); w2: (C, mid) — the 1x1x1 conv
    weights with their trailing (1,1,1) dims squeezed out."""
    N, C, D, H, W = x_ncdhw.shape
    mid = w1.shape[0]
    S = D * H * W
    itemsize = jnp.dtype(x_ncdhw.dtype).itemsize

    # Free reshape (row-major contiguous): NCDHW -> (N, C, S). No transposes.
    x = x_ncdhw.reshape(N, C, S)

    if C * S * itemsize <= fuse_slab_bytes:
        # ---------- fused single-pass path: x read from HBM exactly once ----
        out = pl.pallas_call(
            _fused_kernel,
            out_shape=jax.ShapeDtypeStruct((N, C, S), x_ncdhw.dtype),
            grid_spec=pltpu.PrefetchScalarGridSpec(
                num_scalar_prefetch=0,
                grid=(N,),
                in_specs=[
                    pl.BlockSpec((1, C, S), lambda n: (n, 0, 0)),
                    pl.BlockSpec((mid, C), lambda n: (0, 0)),
                    pl.BlockSpec((C, mid), lambda n: (0, 0)),
                ],
                out_specs=pl.BlockSpec((1, C, S), lambda n: (n, 0, 0)),
            ),
            compiler_params=pltpu.CompilerParams(
                dimension_semantics=("parallel",),
                vmem_limit_bytes=32 << 20),
        )(x, w1, w2)
    else:
        # ---------- tiled path: hoisted avg, spatially tiled per-voxel fc ---
        # y_avg = fc(mean_spatial(x))  -> (N, C, 1), f32.  O(N*C*mid) flops;
        # XLA fuses the cast into the reduction (one extra read of x).
        mean = jnp.mean(x.astype(jnp.float32), axis=2)               # (N, C)
        h_avg = jnp.maximum(mean @ w1.astype(jnp.float32).T, 0.0)    # (N, mid)
        y_avg = (h_avg @ w2.astype(jnp.float32).T)[..., None]        # (N, C, 1)

        TS = _choose_spatial_tile(S, C, itemsize, max_tile_bytes)
        grid = (N, pl.cdiv(S, TS))

        out = pl.pallas_call(
            _tiled_kernel,
            out_shape=jax.ShapeDtypeStruct((N, C, S), x_ncdhw.dtype),
            grid_spec=pltpu.PrefetchScalarGridSpec(
                num_scalar_prefetch=0,
                grid=grid,
                in_specs=[
                    pl.BlockSpec((1, C, TS), lambda n, s: (n, 0, s)),
                    pl.BlockSpec((1, C, 1), lambda n, s: (n, 0, 0)),
                    pl.BlockSpec((mid, C), lambda n, s: (0, 0)),
                    pl.BlockSpec((C, mid), lambda n, s: (0, 0)),
                ],
                out_specs=pl.BlockSpec((1, C, TS), lambda n, s: (n, 0, s)),
            ),
            compiler_params=pltpu.CompilerParams(
                dimension_semantics=("parallel", "parallel"),
                vmem_limit_bytes=32 << 20),
        )(x, y_avg, w1, w2)

    # Free reshape back to NCDHW.
    return out.reshape(N, C, D, H, W)


def channel_attention_ref(x_ncdhw, w1, w2):
    """Pure-JAX reference mirroring the PyTorch forward."""
    xf = x_ncdhw.astype(jnp.float32)

    def fc(t):  # t: (N, C, d, h, w)
        h1 = jnp.einsum('ncdhw,mc->nmdhw', t, w1)
        h1 = jnp.maximum(h1, 0.0)
        return jnp.einsum('nmdhw,cm->ncdhw', h1, w2)

    avg = jnp.mean(xf, axis=(2, 3, 4), keepdims=True)   # (N, C, 1, 1, 1)
    avg_out = fc(avg)
    max_out = fc(xf)                                     # MaxPool3d(1) = identity
    return jax.nn.sigmoid(avg_out + max_out).astype(x_ncdhw.dtype)


if __name__ == "__main__":
    key = jax.random.PRNGKey(0)
    N, C, D, H, W = 2, 32, 4, 8, 8          # in_planes=32 -> mid = 32 // 16 = 2
    mid = C // 16

    kx, k1, k2 = jax.random.split(key, 3)
    x = jax.random.normal(kx, (N, C, D, H, W), dtype=jnp.float32)
    # Conv3d weights are (mid, C, 1, 1, 1) and (C, mid, 1, 1, 1) in PyTorch;
    # trailing singleton dims squeezed here.
    w1 = jax.random.normal(k1, (mid, C), dtype=jnp.float32) * 0.1
    w2 = jax.random.normal(k2, (C, mid), dtype=jnp.float32) * 0.1

    ref = jax.block_until_ready(channel_attention_ref(x, w1, w2))

    # Path 1: fused single-pass kernel (per-batch slab fits in VMEM).
    out_fused = jax.block_until_ready(channel_attention(x, w1, w2))
    np.testing.assert_allclose(np.asarray(out_fused), np.asarray(ref),
                               rtol=1e-5, atol=1e-5)

    # Path 2: tiled fallback, forced at small shapes (TS=128 -> 2 spatial tiles).
    out_tiled = jax.block_until_ready(
        channel_attention(x, w1, w2, fuse_slab_bytes=0, max_tile_bytes=16 << 10))
    np.testing.assert_allclose(np.asarray(out_tiled), np.asarray(ref),
                               rtol=1e-5, atol=1e-5)

    print("KERNEL_OK")
</pallas_src>

<mosaic_0001>
module attributes {stable_mosaic.version = 11 : i64} {
  func.func @_fused_kernel(%arg0: i32, %arg1: memref<1x32x256xf32, #tpu.memory_space<vmem>>, %arg2: memref<2x32xf32, #tpu.memory_space<vmem>>, %arg3: memref<32x2xf32, #tpu.memory_space<vmem>>, %arg4: memref<1x32x256xf32, #tpu.memory_space<vmem>>) attributes {dimension_semantics = [#tpu.dimension_semantics<parallel>], iteration_bounds = array<i64: 2>, scalar_prefetch = 0 : i64, scratch_operands = 0 : i64, tpu.core_type = #tpu.core_type<tc>, window_params = [{transform_indices = @transform_0, window_bounds = array<i64: 1, 32, 256>}, {pipeline_mode = #tpu.pipeline_mode<synchronous>, transform_indices = @transform_1, window_bounds = array<i64: 2, 32>}, {pipeline_mode = #tpu.pipeline_mode<synchronous>, transform_indices = @transform_2, window_bounds = array<i64: 32, 2>}, {transform_indices = @transform_3, window_bounds = array<i64: 1, 32, 256>}]} {
    %c0 = arith.constant 0 : index
    %c0_0 = arith.constant 0 : index
    %c0_1 = arith.constant 0 : index
    %0 = vector.load %arg1[%c0, %c0_0, %c0_1] : memref<1x32x256xf32, #tpu.memory_space<vmem>>, vector<1x32x256xf32>
    %1 = vector.shape_cast %0 : vector<1x32x256xf32> to vector<32x256xf32>
    %cst = arith.constant dense<0.000000e+00> : vector<32xf32>
    %2 = vector.multi_reduction <add>, %1, %cst [1] : vector<32x256xf32> to vector<32xf32>
    %3 = vector.shape_cast %2 : vector<32xf32> to vector<32x1xf32>
    %cst_2 = arith.constant 2.560000e+02 : f32
    %4 = vector.broadcast %cst_2 : f32 to vector<32x1xf32>
    %5 = arith.divf %3, %4 : vector<32x1xf32>
    %c0_3 = arith.constant 0 : index
    %c0_4 = arith.constant 0 : index
    %6 = vector.load %arg2[%c0_3, %c0_4] : memref<2x32xf32, #tpu.memory_space<vmem>>, vector<2x32xf32>
    %cst_5 = arith.constant dense<0.000000e+00> : vector<2x1xf32>
    %7 = tpu.matmul %6, %5, %cst_5 {dimension_numbers = #tpu.dot_dimension_numbers<[1], [0], [0], [1], [0, 0, 1, 1], [], []>} : vector<2x32xf32>, vector<32x1xf32>, vector<2x1xf32> -> vector<2x1xf32>
    %cst_6 = arith.constant 0.000000e+00 : f32
    %8 = vector.broadcast %cst_6 : f32 to vector<2x1xf32>
    %9 = arith.maximumf %7, %8 : vector<2x1xf32>
    %c0_7 = arith.constant 0 : index
    %c0_8 = arith.constant 0 : index
    %10 = vector.load %arg3[%c0_7, %c0_8] : memref<32x2xf32, #tpu.memory_space<vmem>>, vector<32x2xf32>
    %cst_9 = arith.constant dense<0.000000e+00> : vector<32x1xf32>
    %11 = tpu.matmul %10, %9, %cst_9 {dimension_numbers = #tpu.dot_dimension_numbers<[1], [0], [0], [1], [0, 0, 1, 1], [], []>} : vector<32x2xf32>, vector<2x1xf32>, vector<32x1xf32> -> vector<32x1xf32>
    %c0_10 = arith.constant 0 : index
    %c0_11 = arith.constant 0 : index
    %12 = vector.load %arg2[%c0_10, %c0_11] : memref<2x32xf32, #tpu.memory_space<vmem>>, vector<2x32xf32>
    %cst_12 = arith.constant dense<0.000000e+00> : vector<2x256xf32>
    %13 = tpu.matmul %12, %1, %cst_12 {dimension_numbers = #tpu.dot_dimension_numbers<[1], [0], [0], [1], [0, 0, 1, 1], [], []>} : vector<2x32xf32>, vector<32x256xf32>, vector<2x256xf32> -> vector<2x256xf32>
    %cst_13 = arith.constant 0.000000e+00 : f32
    %14 = vector.broadcast %cst_13 : f32 to vector<2x256xf32>
    %15 = arith.maximumf %13, %14 : vector<2x256xf32>
    %c0_14 = arith.constant 0 : index
    %c0_15 = arith.constant 0 : index
    %16 = vector.load %arg3[%c0_14, %c0_15] : memref<32x2xf32, #tpu.memory_space<vmem>>, vector<32x2xf32>
    %cst_16 = arith.constant dense<0.000000e+00> : vector<32x256xf32>
    %17 = tpu.matmul %16, %15, %cst_16 {dimension_numbers = #tpu.dot_dimension_numbers<[1], [0], [0], [1], [0, 0, 1, 1], [], []>} : vector<32x2xf32>, vector<2x256xf32>, vector<32x256xf32> -> vector<32x256xf32>
    %18 = vector.broadcast %11 : vector<32x1xf32> to vector<32x256xf32>
    %19 = arith.addf %17, %18 : vector<32x256xf32>
    %20 = arith.negf %19 : vector<32x256xf32>
    %21 = math.exp %20 : vector<32x256xf32>
    %cst_17 = arith.constant 1.000000e+00 : f32
    %22 = vector.broadcast %cst_17 : f32 to vector<32x256xf32>
    %23 = arith.addf %22, %21 : vector<32x256xf32>
    %24 = arith.divf %22, %23 : vector<32x256xf32>
    %c0_18 = arith.constant 0 : index
    %c0_19 = arith.constant 0 : index
    %c0_20 = arith.constant 0 : index
    %25 = vector.load %arg4[%c0_18, %c0_19, %c0_20] : memref<1x32x256xf32, #tpu.memory_space<vmem>>, vector<1x32x256xf32>
    %26 = vector.shape_cast %25 : vector<1x32x256xf32> to vector<32x256xf32>
    %27 = vector.shape_cast %24 : vector<32x256xf32> to vector<1x32x256xf32>
    tpu.vector_store %arg4[%c0_18, %c0_19, %c0_20], %27 {strides = array<i32>} : memref<1x32x256xf32, #tpu.memory_space<vmem>>, vector<1x32x256xf32>,
    return
  }
  func.func @transform_0(%arg0: i32) -> (i32, i32, i32) {
    %c0_i32 = arith.constant 0 : i32
    %c0_i32_0 = arith.constant 0 : i32
    %c0_i32_1 = arith.constant 0 : i32
    return %arg0, %c0_i32, %c0_i32_0 : i32, i32, i32
  }
  func.func @transform_1(%arg0: i32) -> (i32, i32) {
    %c0_i32 = arith.constant 0 : i32
    %c0_i32_0 = arith.constant 0 : i32
    %c0_i32_1 = arith.constant 0 : i32
    return %c0_i32, %c0_i32_0 : i32, i32
  }
  func.func @transform_2(%arg0: i32) -> (i32, i32) {
    %c0_i32 = arith.constant 0 : i32
    %c0_i32_0 = arith.constant 0 : i32
    %c0_i32_1 = arith.constant 0 : i32
    return %c0_i32, %c0_i32_0 : i32, i32
  }
  func.func @transform_3(%arg0: i32) -> (i32, i32, i32) {
    %c0_i32 = arith.constant 0 : i32
    %c0_i32_0 = arith.constant 0 : i32
    %c0_i32_1 = arith.constant 0 : i32
    return %arg0, %c0_i32, %c0_i32_0 : i32, i32, i32
  }
}

</mosaic_0001>

<llo_original>
// kernel: tpu_custom_call.1
$region0: #{tpu_custom_call.1}
  #allocation0 [shape = 'u32[]', space=smem, size = 0x4, offset = 0x4, fixed_abs, tag = 'smem constant byte address 0x4 - core index']
  #allocation1 [shape = 'u32[144,128]{1,0:T(1,128)}', space=vmem, size = 0x12000, scoped, tag = 'internal scratch']
  %s0 = inlined_call_operand.hbm [shape: f32[2,32,256], index: 0, kind: input, shape index: {}]
  %s1 = inlined_call_operand.vmem [shape: f32[2,32], index: 1, kind: input, shape index: {}]
  %s2 = inlined_call_operand.vmem [shape: f32[32,2], index: 2, kind: input, shape index: {}]
  %s3 = inlined_call_operand.hbm [shape: f32[2,32,256], index: 3, kind: output, shape index: {}]
  %s4 = sld [smem:[#allocation0]]
  $region49: #{tpu_custom_call.1} parent=0
    _
  %s6 = ssub.s32 1, %s4
  %s7 = scalar_select 0, %s6, %s4
  $region1: #{tpu_custom_call.1} parent=0
    #allocation2 [shape = 'u8[65536]{0}', space=vmem, size = 0x10000, scoped, tag = 'input window, operand 0']
    #allocation3 [shape = 's32[2]{0}', space=sflag, size = 0x8, scoped, tag = 'scoped memory for tpu_custom_call.1']
    #allocation4 [shape = 's32[2]{0}', space=sflag, size = 0x8, scoped, tag = 'scoped memory for tpu_custom_call.1']
    #allocation5 [shape = 'u8[65536]{0}', space=vmem, size = 0x10000, scoped, tag = 'output window, operand 0']
    %8 = vsyncpa [#allocation3], 0
    %s9 = scalar_lea.sflag [#allocation3], 1
    %10 = vsyncpa %s9, 0
    %11 = vsyncpa [#allocation4], 0
    %s12 = scalar_lea.sflag [#allocation4], 1
    %13 = vsyncpa %s12, 0
    loop: start=0, step=1, limit=4
    $region2: #{tpu_custom_call.1} parent=1 // loop_pre_header
      _
    $region3: #{tpu_custom_call.1} parent=1 // loop_header
      %s15 = sphi 0, %s19
      %p16 = scmp.ge.s32.totalorder %s15, 4
      %s25 = sphi 0, %s27
      %s28 = sphi 0, %s25
      %s29 = sphi 0, %s28
      %s45 = sphi 0, %s29
      %s49 = sphi 0, %s49
      %s51 = sphi 0, %s49
      %s52 = sphi 0, %s51
      %s66 = sphi 0, %s52
      %s70 = sphi 0, %s70
      %s72 = sphi 0, %s70
      %s73 = sphi 0, %s72
      %s87 = sphi 0, %s73
      %s93 = sphi 0, %s95
      %s96 = sphi 0, %s93
      %s97 = sphi 0, %s96
      %s113 = sphi 0, %s97
    $region4: #{tpu_custom_call.1} parent=1 // loop_header_branch
      %18 = sbr.rel (%p16) target = $region8
    $region5: #{tpu_custom_call.1} parent=1 // loop_body
      %s20 = ssub.s32 %s15, 1
      %s21 = ssub.s32 %s15, 2
      %s22 = sadd.s32 %s15, 1
      %s23 = ssub.s32 %s15, %s22
      %p24 = scmp.eq.s32.totalorder %s23, 0
      %s26 = sadd.s32 %s25, 1
      %s27 = scalar_select %p24, %s25, %s26
      %p30 = pneg %p24
      %p31 = scmp.eq.s32.totalorder %s15, 1
      %p32 = por %p30, %p31
      %p33 = scmp.ne.s32.totalorder %s25, %s28
      %p34 = scmp.eq.s32.totalorder %s15, 0
      %p35 = por %p33, %p34
      %p36 = scmp.ne.s32.totalorder %s25, %s28
      %p37 = scmp.eq.s32.totalorder %s20, 1
      %p38 = por %p36, %p37
      %p39 = scmp.ne.s32.totalorder %s28, %s29
      %p40 = scmp.eq.s32.totalorder %s20, 0
      %p41 = por %p39, %p40
      %p42 = scmp.ne.s32.totalorder %s28, %s29
      %p43 = scmp.eq.s32.totalorder %s21, 1
      %p44 = por %p42, %p43
      %p46 = scmp.ne.s32.totalorder %s29, %s45
      %p47 = scmp.eq.s32.totalorder %s21, 0
      %p48 = por %p46, %p47
      %s50 = sadd.s32 %s49, 1
      %p53 = scmp.eq.s32.totalorder %s15, 1
      %p54 = scmp.ne.s32.totalorder %s49, %s51
      %p55 = scmp.eq.s32.totalorder %s15, 0
      %p56 = por %p54, %p55
      %p57 = scmp.ne.s32.totalorder %s49, %s51
      %p58 = scmp.eq.s32.totalorder %s20, 1
      %p59 = por %p57, %p58
      %p60 = scmp.ne.s32.totalorder %s51, %s52
      %p61 = scmp.eq.s32.totalorder %s20, 0
      %p62 = por %p60, %p61
      %p63 = scmp.ne.s32.totalorder %s51, %s52
      %p64 = scmp.eq.s32.totalorder %s21, 1
      %p65 = por %p63, %p64
      %p67 = scmp.ne.s32.totalorder %s52, %s66
      %p68 = scmp.eq.s32.totalorder %s21, 0
      %p69 = por %p67, %p68
      %s71 = sadd.s32 %s70, 1
      %p74 = scmp.eq.s32.totalorder %s15, 1
      %p75 = scmp.ne.s32.totalorder %s70, %s72
      %p76 = scmp.eq.s32.totalorder %s15, 0
      %p77 = por %p75, %p76
      %p78 = scmp.ne.s32.totalorder %s70, %s72
      %p79 = scmp.eq.s32.totalorder %s20, 1
      %p80 = por %p78, %p79
      %p81 = scmp.ne.s32.totalorder %s72, %s73
      %p82 = scmp.eq.s32.totalorder %s20, 0
      %p83 = por %p81, %p82
      %p84 = scmp.ne.s32.totalorder %s72, %s73
      %p85 = scmp.eq.s32.totalorder %s21, 1
      %p86 = por %p84, %p85
      %p88 = scmp.ne.s32.totalorder %s73, %s87
      %p89 = scmp.eq.s32.totalorder %s21, 0
      %p90 = por %p88, %p89
      %s91 = ssub.s32 %s15, %s22
      %p92 = scmp.eq.s32.totalorder %s91, 0
      %s94 = sadd.s32 %s93, 1
      %s95 = scalar_select %p92, %s93, %s94
      %p98 = pneg %p92
      %p99 = scmp.eq.s32.totalorder %s15, 1
      %p100 = por %p98, %p99
      %p101 = scmp.ne.s32.totalorder %s93, %s96
      %p102 = scmp.eq.s32.totalorder %s15, 0
      %p103 = por %p101, %p102
      %p104 = scmp.ne.s32.totalorder %s93, %s96
      %p105 = scmp.eq.s32.totalorder %s20, 1
      %p106 = por %p104, %p105
      %p107 = scmp.ne.s32.totalorder %s96, %s97
      %p108 = scmp.eq.s32.totalorder %s20, 0
      %p109 = por %p107, %p108
      %p110 = scmp.ne.s32.totalorder %s96, %s97
      %p111 = scmp.eq.s32.totalorder %s21, 1
      %p112 = por %p110, %p111
      %p114 = scmp.ne.s32.totalorder %s97, %s113
      %p115 = scmp.eq.s32.totalorder %s21, 0
      %p116 = por %p114, %p115
      %p117 = scmp.le.s32.totalorder 1, %s15
      %p118 = scmp.lt.s32.totalorder %s15, 3
      %p119 = pnand %p117, %p118
      %p120 = pneg %p119
      // Predicated region
      $region9: #{tpu_custom_call.1} parent=5 // pred_check
        _
      $region10: #{tpu_custom_call.1} parent=5 // pred_check_branch
        %122 = sbr.rel (%p119) target = $region12
      $region11: #{tpu_custom_call.1} parent=5 // pred_region
        %s123 = ssub.s32 %s15, 1
        // Predicated region
        $region13: #{tpu_custom_call.1} parent=11 // pred_check
          %p124 = pneg %p62
        $region14: #{tpu_custom_call.1} parent=11 // pred_check_branch
          %126 = sbr.rel (%p124) target = $region16
        $region15: #{tpu_custom_call.1} parent=11 // pred_region
          _
        $region16: #{tpu_custom_call.1} parent=11 // pred_fallthru
          _
        // Predicated region
        $region17: #{tpu_custom_call.1} parent=11 // pred_check
          %p127 = pneg %p83
        $region18: #{tpu_custom_call.1} parent=11 // pred_check_branch
          %129 = sbr.rel (%p127) target = $region20
        $region19: #{tpu_custom_call.1} parent=11 // pred_region
          _
        $region20: #{tpu_custom_call.1} parent=11 // pred_fallthru
          _
      $region12: #{tpu_custom_call.1} parent=5 // pred_fallthru
        _
      %p130 = scmp.lt.s32.totalorder %s15, 2
      // Predicated region
      $region21: #{tpu_custom_call.1} parent=5 // pred_check
        %p131 = pneg %p130
      $region22: #{tpu_custom_call.1} parent=5 // pred_check_branch
        %133 = sbr.rel (%p131) target = $region24
      $region23: #{tpu_custom_call.1} parent=5 // pred_region
        // Predicated region
        $region25: #{tpu_custom_call.1} parent=23 // pred_check
          %p134 = pneg %p35
        $region26: #{tpu_custom_call.1} parent=23 // pred_check_branch
          %136 = sbr.rel (%p134) target = $region28
        $region27: #{tpu_custom_call.1} parent=23 // pred_region
          %s137 = sand.u32 %s25, 1
          %s138 = scalar_lea.sflag [#allocation3], %s137
          %s139 = sand.u32 %s25, 1
          %s140 = smul.addr %s139, 64
          %s141 = scalar_lea.vmem [#allocation2], %s140
          %s143 = ssub.s32 1024, 1024
          %144 = vsyncadd %s138, %s143
          %s145 = smul.addr %s15, 8
          %s146 = smul.addr %s145, 128
          %s147 = scalar_lea.hbm %s0, %s146
          %s148 = sshll.u32 %s141, 4
          %s149 = int_to_ptr.vmem [resolvable:$true] %s148
          %154 = dma.hbm_to_vmem [thread:$0]  %s147, 1024, %s149, %s138, 256, 256, 16
        $region28: #{tpu_custom_call.1} parent=23 // pred_fallthru
          _
      $region24: #{tpu_custom_call.1} parent=5 // pred_fallthru
        _
      %p155 = scmp.le.s32.totalorder 1, %s15
      %p156 = scmp.lt.s32.totalorder %s15, 3
      %p157 = pnand %p155, %p156
      %p158 = pneg %p157
      // Predicated region
      $region29: #{tpu_custom_call.1} parent=5 // pred_check
        _
      $region30: #{tpu_custom_call.1} parent=5 // pred_check_branch
        %160 = sbr.rel (%p157) target = $region32
      $region31: #{tpu_custom_call.1} parent=5 // pred_region
        %s161 = ssub.s32 %s15, 1
        %s162 = sand.u32 %s28, 1
        %s163 = scalar_lea.sflag [#allocation3], %s162
        %s164 = sand.u32 %s28, 1
        %s165 = smul.addr %s164, 64
        %s166 = scalar_lea.vmem [#allocation2], %s165
        // Predicated region
        $region33: #{tpu_custom_call.1} parent=31 // pred_check
          %p167 = pneg %p41
        $region34: #{tpu_custom_call.1} parent=31 // pred_check_branch
          %169 = sbr.rel (%p167) target = $region36
        $region35: #{tpu_custom_call.1} parent=31 // pred_region
          %170 = dma.done %s163, 1024
        $region36: #{tpu_custom_call.1} parent=31 // pred_fallthru
          _
        %s171 = sand.u32 %s28, 1
        %s172 = scalar_lea.sflag [#allocation3], %s171
        %s173 = sand.u32 %s28, 1
        %s174 = smul.addr %s173, 64
        %s175 = scalar_lea.vmem [#allocation2], %s174
        %p176 = pneg %p41
        %p177 = pneg %p38
        %p178 = pneg %p62
        %p179 = pneg %p59
        %p180 = pneg %p83
        %p181 = pneg %p80
        %p182 = pneg %p109
        %p183 = pneg %p106
        %s184 = sand.u32 %s96, 1
        %s185 = scalar_lea.sflag [#allocation4], %s184
        %s186 = sand.u32 %s96, 1
        %s187 = smul.addr %s186, 64
        %s188 = scalar_lea.vmem [#allocation5], %s187
        %v189 = vld [vmem:[%s166] sm:$0xff]
        %v190 = vld [vmem:[%s166 + $0x8] sm:$0xff]
        %v191 = vld [vmem:[%s166 + $0x10] sm:$0xff]
        %v192 = vld [vmem:[%s166 + $0x18] sm:$0xff]
        %v193 = vld [vmem:[%s166 + $0x20] sm:$0xff]
        %v194 = vld [vmem:[%s166 + $0x28] sm:$0xff]
        %v195 = vld [vmem:[%s166 + $0x30] sm:$0xff]
        %v196 = vld [vmem:[%s166 + $0x38] sm:$0xff]
        %v197 = vadd.f32 %v189, %v190
        %198 = vadd.xlane.f32.xlu0 %v197
        %v199 = vpop.xlane.xlu0 %198
        %v200 = vadd.f32 %v191, %v192
        %201 = vadd.xlane.f32.xlu0 %v200
        %v202 = vpop.xlane.xlu0 %201
        %v203 = vadd.f32 %v193, %v194
        %204 = vadd.xlane.f32.xlu0 %v203
        %v205 = vpop.xlane.xlu0 %204
        %v206 = vadd.f32 %v195, %v196
        %207 = vadd.xlane.f32.xlu0 %v206
        %v208 = vpop.xlane.xlu0 %207
        %v209 = vrcp.pop 256.0
        %v210 = vmul.f32 %v199, %v209
        %v211 = vmul.f32 %v202, %v209
        %v212 = vmul.f32 %v205, %v209
        %v213 = vmul.f32 %v208, %v209
        %v214 = vld [vmem:[%s1] sm:$0x3]
        %vm215 = vcmask 261120
        %v217 = vsel %vm215, %v214, 0
        %219 = vmatprep.subr.mxu0 0.0
        %220 = vmatpush1.msra.mxu0 %v210
        %221 = vmatprep.subr.mxu0 0.0
        %222 = vmatpush1.msra.mxu0 %v211
        %223 = vmatprep.subr.mxu0 0.0
        %224 = vmatpush1.msra.mxu0 %v212
        %225 = vmatprep.subr.mxu0 0.0
        %226 = vmatpush1.msra.mxu0 %v213
        %227 = vmatprep.subr.mxu0 0.0
        %228 = vmatpush1.msra.mxu0 0.0
        %229 = vmatprep.subr.mxu0 0.0
        %230 = vmatpush1.msra.mxu0 0.0
        %231 = vmatprep.subr.mxu0 0.0
        %232 = vmatpush1.msra.mxu0 0.0
        %233 = vmatprep.subr.mxu0 0.0
        %234 = vmatpush1.msra.mxu0 0.0
        %235 = vmatprep.subr.mxu0 0.0
        %236 = vmatpush1.msra.mxu0 0.0
        %237 = vmatprep.subr.mxu0 0.0
        %238 = vmatpush1.msra.mxu0 0.0
        %239 = vmatprep.subr.mxu0 0.0
        %240 = vmatpush1.msra.mxu0 0.0
        %241 = vmatprep.subr.mxu0 0.0
        %242 = vmatpush1.msra.mxu0 0.0
        %243 = vmatprep.subr.mxu0 0.0
        %244 = vmatpush1.msra.mxu0 0.0
        %245 = vmatprep.subr.mxu0 0.0
        %246 = vmatpush1.msra.mxu0 0.0
        %247 = vmatprep.subr.mxu0 0.0
        %248 = vmatpush1.msra.mxu0 0.0
        %249 = vmatprep.subr.mxu0 0.0
        %250 = vmatpush1.msra.mxu0 0.0
        %251 = vmatprep.subr.mxu0 0.0
        %252 = vmatpush1.msra.mxu0 0.0
        %253 = vmatprep.subr.mxu0 0.0
        %254 = vmatpush1.msra.mxu0 0.0
        %255 = vmatprep.subr.mxu0 0.0
        %256 = vmatpush1.msra.mxu0 0.0
        %257 = vmatprep.subr.mxu0 0.0
        %258 = vmatpush1.msra.mxu0 0.0
        %259 = vmatprep.subr.mxu0 0.0
        %260 = vmatpush1.msra.mxu0 0.0
        %261 = vmatprep.subr.mxu0 0.0
        %262 = vmatpush1.msra.mxu0 0.0
        %263 = vmatprep.subr.mxu0 0.0
        %264 = vmatpush1.msra.mxu0 0.0
        %265 = vmatprep.subr.mxu0 0.0
        %266 = vmatpush1.msra.mxu0 0.0
        %267 = vmatprep.subr.mxu0 0.0
        %268 = vmatpush1.msra.mxu0 0.0
        %269 = vmatprep.subr.mxu0 0.0
        %270 = vmatpush1.msra.mxu0 0.0
        %271 = vmatprep.subr.mxu0 0.0
        %272 = vmatpush1.msra.mxu0 0.0
        %273 = vmatprep.subr.mxu0 0.0
        %274 = vmatpush1.msra.mxu0 0.0
        %275 = vmatprep.subr.mxu0 0.0
        %276 = vmatpush1.msra.mxu0 0.0
        %277 = vmatprep.subr.mxu0 0.0
        %278 = vmatpush1.msra.mxu0 0.0
        %279 = vmatprep.subr.mxu0 0.0
        %280 = vmatpush1.msra.mxu0 0.0
        %281 = vmatprep.subr.mxu0 0.0
        %282 = vmatpush1.msra.mxu0 0.0
        %283 = vmatprep.mubr.f32.mxu0 0.0
        %284 = vmatmul.mubr.f32.gmra.mrb[0].mxu0 %v217
        %v285 = vpop.f32.mrb[0].mxu0
        %v286 = vadd.f32 0.0, %v285
        %v287 = vpop.f32.mrb[0].mxu0
        %288 = vdwg.mxu0
        %v289 = vmax.f32 %v286, 0.0
        %v290 = vld [vmem:[%s2] sm:$0xff]
        %v291 = vld [vmem:[%s2 + $0x8] sm:$0xff]
        %v292 = vld [vmem:[%s2 + $0x10] sm:$0xff]
        %v293 = vld [vmem:[%s2 + $0x18] sm:$0xff]
        %vm294 = vcmask 15360
        %v296 = vsel %vm294, %v290, 0
        %v299 = vsel %vm294, %v291, 0
        %v302 = vsel %vm294, %v292, 0
        %v305 = vsel %vm294, %v293, 0
        %vm307 = vcmask 1041408
        %v309 = vsel %vm307, %v289, 0
        %311 = vmatprep.subr.mxu0 0.0
        %312 = vmatpush1.msra.mxu0 %v309
        %313 = vmatprep.subr.mxu0 0.0
        %314 = vmatpush1.msra.mxu0 0.0
        %315 = vmatprep.subr.mxu0 0.0
        %316 = vmatpush1.msra.mxu0 0.0
        %317 = vmatprep.subr.mxu0 0.0
        %318 = vmatpush1.msra.mxu0 0.0
        %319 = vmatprep.subr.mxu0 0.0
        %320 = vmatpush1.msra.mxu0 0.0
        %321 = vmatprep.subr.mxu0 0.0
        %322 = vmatpush1.msra.mxu0 0.0
        %323 = vmatprep.subr.mxu0 0.0
        %324 = vmatpush1.msra.mxu0 0.0
        %325 = vmatprep.subr.mxu0 0.0
        %326 = vmatpush1.msra.mxu0 0.0
        %327 = vmatprep.subr.mxu0 0.0
        %328 = vmatpush1.msra.mxu0 0.0
        %329 = vmatprep.subr.mxu0 0.0
        %330 = vmatpush1.msra.mxu0 0.0
        %331 = vmatprep.subr.mxu0 0.0
        %332 = vmatpush1.msra.mxu0 0.0
        %333 = vmatprep.subr.mxu0 0.0
        %334 = vmatpush1.msra.mxu0 0.0
        %335 = vmatprep.subr.mxu0 0.0
        %336 = vmatpush1.msra.mxu0 0.0
        %337 = vmatprep.subr.mxu0 0.0
        %338 = vmatpush1.msra.mxu0 0.0
        %339 = vmatprep.subr.mxu0 0.0
        %340 = vmatpush1.msra.mxu0 0.0
        %341 = vmatprep.subr.mxu0 0.0
        %342 = vmatpush1.msra.mxu0 0.0
        %343 = vmatprep.subr.mxu0 0.0
        %344 = vmatpush1.msra.mxu0 0.0
        %345 = vmatprep.subr.mxu0 0.0
        %346 = vmatpush1.msra.mxu0 0.0
        %347 = vmatprep.subr.mxu0 0.0
        %348 = vmatpush1.msra.mxu0 0.0
        %349 = vmatprep.subr.mxu0 0.0
        %350 = vmatpush1.msra.mxu0 0.0
        %351 = vmatprep.subr.mxu0 0.0
        %352 = vmatpush1.msra.mxu0 0.0
        %353 = vmatprep.subr.mxu0 0.0
        %354 = vmatpush1.msra.mxu0 0.0
        %355 = vmatprep.subr.mxu0 0.0
        %356 = vmatpush1.msra.mxu0 0.0
        %357 = vmatprep.subr.mxu0 0.0
        %358 = vmatpush1.msra.mxu0 0.0
        %359 = vmatprep.subr.mxu0 0.0
        %360 = vmatpush1.msra.mxu0 0.0
        %361 = vmatprep.subr.mxu0 0.0
        %362 = vmatpush1.msra.mxu0 0.0
        %363 = vmatprep.subr.mxu0 0.0
        %364 = vmatpush1.msra.mxu0 0.0
        %365 = vmatprep.subr.mxu0 0.0
        %366 = vmatpush1.msra.mxu0 0.0
        %367 = vmatprep.subr.mxu0 0.0
        %368 = vmatpush1.msra.mxu0 0.0
        %369 = vmatprep.subr.mxu0 0.0
        %370 = vmatpush1.msra.mxu0 0.0
        %371 = vmatprep.subr.mxu0 0.0
        %372 = vmatpush1.msra.mxu0 0.0
        %373 = vmatprep.subr.mxu0 0.0
        %374 = vmatpush1.msra.mxu0 0.0
        %375 = vmatprep.mubr.f32.mxu0 0.0
        %376 = vmatmul.mubr.f32.gmra.mrb[0].mxu0 %v296
        %v377 = vpop.f32.mrb[0].mxu0
        %v378 = vadd.f32 0.0, %v377
        %v379 = vpop.f32.mrb[0].mxu0
        %380 = vmatprep.mubr.f32.mxu0 0.0
        %381 = vmatmul.mubr.f32.gmra.mrb[0].mxu0 %v299
        %v382 = vpop.f32.mrb[0].mxu0
        %v383 = vadd.f32 0.0, %v382
        %v384 = vpop.f32.mrb[0].mxu0
        %385 = vmatprep.mubr.f32.mxu0 0.0
        %386 = vmatmul.mubr.f32.gmra.mrb[0].mxu0 %v302
        %v387 = vpop.f32.mrb[0].mxu0
        %v388 = vadd.f32 0.0, %v387
        %v389 = vpop.f32.mrb[0].mxu0
        %390 = vmatprep.mubr.f32.mxu0 0.0
        %391 = vmatmul.mubr.f32.gmra.mrb[0].mxu0 %v305
        %v392 = vpop.f32.mrb[0].mxu0
        %v393 = vadd.f32 0.0, %v392
        %v394 = vpop.f32.mrb[0].mxu0
        %395 = vdwg.mxu0
        %396 = vmatprep.subr.mxu0 %v190
        %397 = vmatpush1.msra.mxu0 %v189
        %398 = vmatprep.subr.mxu0 %v192
        %399 = vmatpush1.msra.mxu0 %v191
        %400 = vmatprep.subr.mxu0 %v194
        %401 = vmatpush1.msra.mxu0 %v193
        %402 = vmatprep.subr.mxu0 %v196
        %403 = vmatpush1.msra.mxu0 %v195
        %404 = vmatprep.subr.mxu0 0.0
        %405 = vmatpush1.msra.mxu0 0.0
        %406 = vmatprep.subr.mxu0 0.0
        %407 = vmatpush1.msra.mxu0 0.0
        %408 = vmatprep.subr.mxu0 0.0
        %409 = vmatpush1.msra.mxu0 0.0
        %410 = vmatprep.subr.mxu0 0.0
        %411 = vmatpush1.msra.mxu0 0.0
        %412 = vmatprep.subr.mxu0 0.0
        %413 = vmatpush1.msra.mxu0 0.0
        %414 = vmatprep.subr.mxu0 0.0
        %415 = vmatpush1.msra.mxu0 0.0
        %416 = vmatprep.subr.mxu0 0.0
        %417 = vmatpush1.msra.mxu0 0.0
        %418 = vmatprep.subr.mxu0 0.0
        %419 = vmatpush1.msra.mxu0 0.0
        %420 = vmatprep.subr.mxu0 0.0
        %421 = vmatpush1.msra.mxu0 0.0
        %422 = vmatprep.subr.mxu0 0.0
        %423 = vmatpush1.msra.mxu0 0.0
        %424 = vmatprep.subr.mxu0 0.0
        %425 = vmatpush1.msra.mxu0 0.0
        %426 = vmatprep.subr.mxu0 0.0
        %427 = vmatpush1.msra.mxu0 0.0
        %428 = vmatprep.subr.mxu0 0.0
        %429 = vmatpush1.msra.mxu0 0.0
        %430 = vmatprep.subr.mxu0 0.0
        %431 = vmatpush1.msra.mxu0 0.0
        %432 = vmatprep.subr.mxu0 0.0
        %433 = vmatpush1.msra.mxu0 0.0
        %434 = vmatprep.subr.mxu0 0.0
        %435 = vmatpush1.msra.mxu0 0.0
        %436 = vmatprep.subr.mxu0 0.0
        %437 = vmatpush1.msra.mxu0 0.0
        %438 = vmatprep.subr.mxu0 0.0
        %439 = vmatpush1.msra.mxu0 0.0
        %440 = vmatprep.subr.mxu0 0.0
        %441 = vmatpush1.msra.mxu0 0.0
        %442 = vmatprep.subr.mxu0 0.0
        %443 = vmatpush1.msra.mxu0 0.0
        %444 = vmatprep.subr.mxu0 0.0
        %445 = vmatpush1.msra.mxu0 0.0
        %446 = vmatprep.subr.mxu0 0.0
        %447 = vmatpush1.msra.mxu0 0.0
        %448 = vmatprep.subr.mxu0 0.0
        %449 = vmatpush1.msra.mxu0 0.0
        %450 = vmatprep.subr.mxu0 0.0
        %451 = vmatpush1.msra.mxu0 0.0
        %452 = vmatprep.subr.mxu0 0.0
        %453 = vmatpush1.msra.mxu0 0.0
        %454 = vmatprep.subr.mxu0 0.0
        %455 = vmatpush1.msra.mxu0 0.0
        %456 = vmatprep.subr.mxu0 0.0
        %457 = vmatpush1.msra.mxu0 0.0
        %458 = vmatprep.subr.mxu0 0.0
        %459 = vmatpush1.msra.mxu0 0.0
        %460 = vmatprep.mubr.f32.mxu0 0.0
        %461 = vmatmul.mubr.f32.gmra.mrb[0].mxu0 %v217
        %v462 = vpop.f32.mrb[0].mxu0
        %v463 = vadd.f32 0.0, %v462
        %v464 = vpop.f32.mrb[0].mxu0
        %v465 = vadd.f32 0.0, %v464
        %466 = vdwg.mxu0
        %v467 = vmax.f32 %v463, 0.0
        %v468 = vmax.f32 %v465, 0.0
        %470 = vset.pattern.permute.xlu0 0
        %471 = vperm.xlu0 %470, %v378
        %v472 = vpop.permute.xlu0 %471
        %475 = vset.pattern.permute.xlu0 0
        %476 = vperm.xlu0 %475, %v383
        %v477 = vpop.permute.xlu0 %476
        %480 = vset.pattern.permute.xlu0 0
        %481 = vperm.xlu0 %480, %v388
        %v482 = vpop.permute.xlu0 %481
        %485 = vset.pattern.permute.xlu0 0
        %486 = vperm.xlu0 %485, %v393
        %v487 = vpop.permute.xlu0 %486
        %v490 = vsel %vm307, %v467, 0
        %v493 = vsel %vm307, %v468, 0
        %495 = vmatprep.subr.mxu0 %v493
        %496 = vmatpush1.msra.mxu0 %v490
        %497 = vmatprep.subr.mxu0 0.0
        %498 = vmatpush1.msra.mxu0 0.0
        %499 = vmatprep.subr.mxu0 0.0
        %500 = vmatpush1.msra.mxu0 0.0
        %501 = vmatprep.subr.mxu0 0.0
        %502 = vmatpush1.msra.mxu0 0.0
        %503 = vmatprep.subr.mxu0 0.0
        %504 = vmatpush1.msra.mxu0 0.0
        %505 = vmatprep.subr.mxu0 0.0
        %506 = vmatpush1.msra.mxu0 0.0
        %507 = vmatprep.subr.mxu0 0.0
        %508 = vmatpush1.msra.mxu0 0.0
        %509 = vmatprep.subr.mxu0 0.0
        %510 = vmatpush1.msra.mxu0 0.0
        %511 = vmatprep.subr.mxu0 0.0
        %512 = vmatpush1.msra.mxu0 0.0
        %513 = vmatprep.subr.mxu0 0.0
        %514 = vmatpush1.msra.mxu0 0.0
        %515 = vmatprep.subr.mxu0 0.0
        %516 = vmatpush1.msra.mxu0 0.0
        %517 = vmatprep.subr.mxu0 0.0
        %518 = vmatpush1.msra.mxu0 0.0
        %519 = vmatprep.subr.mxu0 0.0
        %520 = vmatpush1.msra.mxu0 0.0
        %521 = vmatprep.subr.mxu0 0.0
        %522 = vmatpush1.msra.mxu0 0.0
        %523 = vmatprep.subr.mxu0 0.0
        %524 = vmatpush1.msra.mxu0 0.0
        %525 = vmatprep.subr.mxu0 0.0
        %526 = vmatpush1.msra.mxu0 0.0
        %527 = vmatprep.subr.mxu0 0.0
        %528 = vmatpush1.msra.mxu0 0.0
        %529 = vmatprep.subr.mxu0 0.0
        %530 = vmatpush1.msra.mxu0 0.0
        %531 = vmatprep.subr.mxu0 0.0
        %532 = vmatpush1.msra.mxu0 0.0
        %533 = vmatprep.subr.mxu0 0.0
        %534 = vmatpush1.msra.mxu0 0.0
        %535 = vmatprep.subr.mxu0 0.0
        %536 = vmatpush1.msra.mxu0 0.0
        %537 = vmatprep.subr.mxu0 0.0
        %538 = vmatpush1.msra.mxu0 0.0
        %539 = vmatprep.subr.mxu0 0.0
        %540 = vmatpush1.msra.mxu0 0.0
        %541 = vmatprep.subr.mxu0 0.0
        %542 = vmatpush1.msra.mxu0 0.0
        %543 = vmatprep.subr.mxu0 0.0
        %544 = vmatpush1.msra.mxu0 0.0
        %545 = vmatprep.subr.mxu0 0.0
        %546 = vmatpush1.msra.mxu0 0.0
        %547 = vmatprep.subr.mxu0 0.0
        %548 = vmatpush1.msra.mxu0 0.0
        %549 = vmatprep.subr.mxu0 0.0
        %550 = vmatpush1.msra.mxu0 0.0
        %551 = vmatprep.subr.mxu0 0.0
        %552 = vmatpush1.msra.mxu0 0.0
        %553 = vmatprep.subr.mxu0 0.0
        %554 = vmatpush1.msra.mxu0 0.0
        %555 = vmatprep.subr.mxu0 0.0
        %556 = vmatpush1.msra.mxu0 0.0
        %557 = vmatprep.subr.mxu0 0.0
        %558 = vmatpush1.msra.mxu0 0.0
        %559 = vmatprep.mubr.f32.mxu0 0.0
        %560 = vmatmul.mubr.f32.gmra.mrb[0].mxu0 %v296
        %v561 = vpop.f32.mrb[0].mxu0
        %v562 = vadd.f32 %v472, %v561
        %v563 = vpop.f32.mrb[0].mxu0
        %v564 = vadd.f32 %v472, %v563
        %565 = vmatprep.mubr.f32.mxu0 0.0
        %566 = vmatmul.mubr.f32.gmra.mrb[0].mxu0 %v299
        %v567 = vpop.f32.mrb[0].mxu0
        %v568 = vadd.f32 %v477, %v567
        %v569 = vpop.f32.mrb[0].mxu0
        %v570 = vadd.f32 %v477, %v569
        %571 = vmatprep.mubr.f32.mxu0 0.0
        %572 = vmatmul.mubr.f32.gmra.mrb[0].mxu0 %v302
        %v573 = vpop.f32.mrb[0].mxu0
        %v574 = vadd.f32 %v482, %v573
        %v575 = vpop.f32.mrb[0].mxu0
        %v576 = vadd.f32 %v482, %v575
        %577 = vmatprep.mubr.f32.mxu0 0.0
        %578 = vmatmul.mubr.f32.gmra.mrb[0].mxu0 %v305
        %v579 = vpop.f32.mrb[0].mxu0
        %v580 = vadd.f32 %v487, %v579
        %v581 = vpop.f32.mrb[0].mxu0
        %v582 = vadd.f32 %v487, %v581
        %583 = vdwg.mxu0
        %v584 = vxor.u32 %v562, 2147483648
        %v585 = vxor.u32 %v564, 2147483648
        %v586 = vxor.u32 %v568, 2147483648
        %v587 = vxor.u32 %v570, 2147483648
        %v588 = vxor.u32 %v574, 2147483648
        %v589 = vxor.u32 %v576, 2147483648
        %v590 = vxor.u32 %v580, 2147483648
        %v591 = vxor.u32 %v582, 2147483648
        %v592 = vmul.f32 %v584, 1.442695
        %v593 = vpow.pop %v592
        %v594 = vmul.f32 %v585, 1.442695
        %v595 = vpow.pop %v594
        %v596 = vmul.f32 %v586, 1.442695
        %v597 = vpow.pop %v596
        %v598 = vmul.f32 %v587, 1.442695
        %v599 = vpow.pop %v598
        %v600 = vmul.f32 %v588, 1.442695
        %v601 = vpow.pop %v600
        %v602 = vmul.f32 %v589, 1.442695
        %v603 = vpow.pop %v602
        %v604 = vmul.f32 %v590, 1.442695
        %v605 = vpow.pop %v604
        %v606 = vmul.f32 %v591, 1.442695
        %v607 = vpow.pop %v606
        %v608 = vadd.f32 %v593, 1.0
        %v609 = vadd.f32 %v595, 1.0
        %v610 = vadd.f32 %v597, 1.0
        %v611 = vadd.f32 %v599, 1.0
        %v612 = vadd.f32 %v601, 1.0
        %v613 = vadd.f32 %v603, 1.0
        %v614 = vadd.f32 %v605, 1.0
        %v615 = vadd.f32 %v607, 1.0
        %v616 = vrcp.pop %v608
        %v617 = vmul.f32 1.0, %v616
        %v618 = vrcp.pop %v609
        %v619 = vmul.f32 1.0, %v618
        %v620 = vrcp.pop %v610
        %v621 = vmul.f32 1.0, %v620
        %v622 = vrcp.pop %v611
        %v623 = vmul.f32 1.0, %v622
        %v624 = vrcp.pop %v612
        %v625 = vmul.f32 1.0, %v624
        %v626 = vrcp.pop %v613
        %v627 = vmul.f32 1.0, %v626
        %v628 = vrcp.pop %v614
        %v629 = vmul.f32 1.0, %v628
        %v630 = vrcp.pop %v615
        %v631 = vmul.f32 1.0, %v630
        %632 = vst [vmem:[%s188] sm:$0xff] %v617
        %633 = vst [vmem:[%s188 + $0x8] sm:$0xff] %v619
        %634 = vst [vmem:[%s188 + $0x10] sm:$0xff] %v621
        %635 = vst [vmem:[%s188 + $0x18] sm:$0xff] %v623
        %636 = vst [vmem:[%s188 + $0x20] sm:$0xff] %v625
        %637 = vst [vmem:[%s188 + $0x28] sm:$0xff] %v627
        %638 = vst [vmem:[%s188 + $0x30] sm:$0xff] %v629
        %639 = vst [vmem:[%s188 + $0x38] sm:$0xff] %v631
        %s640 = sand.u32 %s96, 1
        %s641 = scalar_lea.sflag [#allocation4], %s640
        %s642 = sand.u32 %s96, 1
        %s643 = smul.addr %s642, 64
        %s644 = scalar_lea.vmem [#allocation5], %s643
        // Predicated region
        $region37: #{tpu_custom_call.1} parent=31 // pred_check
          %p645 = pneg %p106
        $region38: #{tpu_custom_call.1} parent=31 // pred_check_branch
          %647 = sbr.rel (%p645) target = $region40
        $region39: #{tpu_custom_call.1} parent=31 // pred_region
          %s649 = ssub.s32 1024, 1024
          %650 = vsyncadd %s641, %s649
          %s651 = smul.addr %s20, 8
          %s652 = smul.addr %s651, 128
          %s653 = scalar_lea.hbm %s3, %s652
          %s654 = sshll.u32 %s644, 4
          %s655 = int_to_ptr.vmem [resolvable:$true] %s654
          %660 = dma.vmem_to_hbm [thread:$0]  %s655, 1024, %s653, %s641, 256, 256, 16
        $region40: #{tpu_custom_call.1} parent=31 // pred_fallthru
          _
      $region32: #{tpu_custom_call.1} parent=5 // pred_fallthru
        _
      %p661 = scmp.le.s32.totalorder 2, %s15
      // Predicated region
      $region41: #{tpu_custom_call.1} parent=5 // pred_check
        %p662 = pneg %p661
      $region42: #{tpu_custom_call.1} parent=5 // pred_check_branch
        %664 = sbr.rel (%p662) target = $region44
      $region43: #{tpu_custom_call.1} parent=5 // pred_region
        %s665 = ssub.s32 %s15, 2
        // Predicated region
        $region45: #{tpu_custom_call.1} parent=43 // pred_check
          %p666 = pneg %p112
        $region46: #{tpu_custom_call.1} parent=43 // pred_check_branch
          %668 = sbr.rel (%p666) target = $region48
        $region47: #{tpu_custom_call.1} parent=43 // pred_region
          %s669 = sand.u32 %s97, 1
          %s670 = scalar_lea.sflag [#allocation4], %s669
          %s671 = sand.u32 %s97, 1
          %s672 = smul.addr %s671, 64
          %s673 = scalar_lea.vmem [#allocation5], %s672
          %674 = dma.done %s670, 1024
        $region48: #{tpu_custom_call.1} parent=43 // pred_fallthru
          _
      $region44: #{tpu_custom_call.1} parent=5 // pred_fallthru
        _
    $region6: #{tpu_custom_call.1} parent=1 // loop_footer
      %s19 = sadd.s32 1, %s15
    $region7: #{tpu_custom_call.1} parent=1 // loop_footer_branch
      %14 = sbr.rel target = $region3
    $region8: #{tpu_custom_call.1} parent=1 // loop_exit
      _
    %675 = vsyncpa [#allocation3], 1
    %s676 = scalar_lea.sflag [#allocation3], 1
    %677 = vsyncpa %s676, 1
    %678 = vsyncpa [#allocation4], 1
    %s679 = scalar_lea.sflag [#allocation4], 1
    %680 = vsyncpa %s679, 1

</llo_original>
